<compile_context>
chip_gen: v7x
topology: tpu7x:2x2x1
jax: 0.10.0
libtpu: 0.0.40
codegen_flags: <defaults>
</compile_context>

<pallas_src>
import functools

import jax
import jax.numpy as jnp
from jax.experimental import pallas as pl
from jax.experimental.pallas import tpu as pltpu


def _outconv_kernel(x_ref, w_ref, b_ref, o_ref, *, bn, cin, use_mxu, vpu_cast_f32):
    # x_ref: (BN, Cin, TM)  w_ref: (Cout, Cin)  b_ref: (Cout, 1)
    # o_ref: (BN, Cout, TM)
    w = w_ref[...]
    bias = b_ref[...].astype(jnp.float32)
    for bi in range(bn):  # bn is small & static
        x = x_ref[bi]  # (Cin, TM)
        if use_mxu:
            # Native-dtype operands (bf16 stays bf16); f32 accumulation on MXU.
            acc = jnp.dot(w, x, preferred_element_type=jnp.float32)
        else:
            xv = x.astype(jnp.float32) if vpu_cast_f32 else x
            wv = w.astype(jnp.float32) if vpu_cast_f32 else w
            # Broadcast FMAs over lane-dense (Cout, TM) vregs, combined with a
            # pairwise tree so the 4 VALU slots can fill.
            parts = [wv[:, c:c + 1] * xv[c:c + 1, :] for c in range(cin)]
            while len(parts) > 1:
                nxt = [parts[i] + parts[i + 1] for i in range(0, len(parts) - 1, 2)]
                if len(parts) % 2:
                    nxt.append(parts[-1])
                parts = nxt
            acc = parts[0].astype(jnp.float32)
        o_ref[bi] = (acc + bias).astype(o_ref.dtype)  # one lane-dense store per slice


def _round_down_mult(x, m):
    return (x // m) * m


def out_conv(x, weight, bias, *, tm=None):
    """1x1 conv. x: (N, Cin, H, W); weight: (Cout, Cin, 1, 1); bias: (Cout,)."""
    N, Cin, H, W = x.shape
    Cout = weight.shape[0]
    L = H * W

    # Free (contiguous) views -- no HBM transposes.
    x3 = x.reshape(N, Cin, L)
    w2 = weight.reshape(Cout, Cin)
    b2 = bias.reshape(Cout, 1)

    # ---- generation info -------------------------------------------------
    try:
        kind = jax.devices()[0].device_kind.lower()
    except Exception:
        kind = ""
    is_v7 = "v7" in kind
    is_v6 = "v6" in kind
    is_v5 = "v5" in kind
    num_cores = 2 if is_v7 else 1
    try:
        vmem_cap = int(pltpu.get_tpu_info().vmem_capacity_bytes)
    except Exception:
        vmem_cap = (64 << 20) if (is_v7 or not (is_v5 or is_v6)) else (128 << 20)
    budget = vmem_cap // 2  # double-buffered working-set budget per step

    # ---- tile sizing (VMEM budget includes sublane padding) ---------------
    itemsize = jnp.dtype(x.dtype).itemsize
    pack = max(8, 32 // max(itemsize, 1))  # sublane packing: f32->8, bf16->16
    cin_pad = -(-Cin // pack) * pack
    cout_pad = -(-Cout // pack) * pack
    padded_bpp = (cin_pad + cout_pad) * itemsize  # padded VMEM bytes / pixel
    hbm_bpp = (Cin + Cout) * itemsize             # true HBM bytes / pixel

    target_bytes = 4 << 20  # ~4 MiB of in+out HBM traffic per grid step
    tm_vmem = max(128, _round_down_mult(budget // (2 * padded_bpp), 128))
    tm_target = max(128, _round_down_mult(target_bytes // hbm_bpp, 128))
    if tm is None:
        tm = min(tm_target, tm_vmem)
    else:
        tm = min(tm, tm_vmem)
    if tm >= L:
        tm = L  # full spatial extent is always a legal block dim
    else:
        tm = max(128, _round_down_mult(tm, 128))

    # Keep >= num_cores grid steps (v7x megacore) when the batch is tiny.
    if N * (-(-L // tm)) < num_cores and L > 128:
        tm_split = max(128, _round_down_mult(-(-L // num_cores), 128))
        if tm_split < L:
            tm = tm_split

    # Small images: fold several batch items per grid step.
    bn = 1
    if tm == L:
        step_bytes = max(1, hbm_bpp * L)
        want_bn = max(1, target_bytes // step_bytes)
        bn_vmem = max(1, budget // (2 * padded_bpp * L))
        bn = int(min(want_bn, bn_vmem, N))
        if num_cores > 1:
            bn = min(bn, max(1, N // num_cores))
        bn = max(1, bn)

    grid = (pl.cdiv(N, bn), pl.cdiv(L, tm))

    # ---- VPU/MXU crossover (generation-aware) ------------------------------
    if is_v7:
        mxu_thresh = 4
    elif is_v6:
        mxu_thresh = 8
    else:  # v5e and unknown: keep small channel mixes on the VPU
        mxu_thresh = 16
    use_mxu = max(Cin, Cout) >= mxu_thresh
    # v5e has no bf16 VALU; f32 inputs are f32 already (no-op cast).
    vpu_cast_f32 = is_v5 or jnp.dtype(x.dtype) == jnp.dtype(jnp.float32)

    # ---- scoped-VMEM limit --------------------------------------------------
    block_bytes = bn * padded_bpp * tm  # padded in+out footprint per step
    vmem_limit = int(min(vmem_cap - (8 << 20),
                         max(16 << 20, 2 * block_bytes + (4 << 20))))

    cost = pl.CostEstimate(
        flops=2 * N * L * Cin * Cout,
        transcendentals=0,
        bytes_accessed=N * L * (Cin + Cout) * itemsize
        + (Cout * Cin + Cout) * jnp.dtype(weight.dtype).itemsize,
    )

    kernel = functools.partial(
        _outconv_kernel, bn=bn, cin=Cin, use_mxu=use_mxu, vpu_cast_f32=vpu_cast_f32)

    out3 = pl.pallas_call(
        kernel,
        out_shape=jax.ShapeDtypeStruct((N, Cout, L), x.dtype),
        grid_spec=pltpu.PrefetchScalarGridSpec(
            num_scalar_prefetch=0,
            grid=grid,
            in_specs=[
                # Lane-dense activation tile: (BN, Cin, TM).
                pl.BlockSpec((bn, Cin, tm), lambda n, j: (n, 0, j)),
                # Small resident parameter tiles (constant index map -> no
                # per-step re-DMA).
                pl.BlockSpec((Cout, Cin), lambda n, j: (0, 0)),
                pl.BlockSpec((Cout, 1), lambda n, j: (0, 0)),
            ],
            out_specs=pl.BlockSpec((bn, Cout, tm), lambda n, j: (n, 0, j)),
        ),
        compiler_params=pltpu.CompilerParams(
            dimension_semantics=("parallel", "parallel"),
            vmem_limit_bytes=vmem_limit,
        ),
        cost_estimate=cost,
    )(x3, w2, b2)

    return out3.reshape(N, Cout, H, W)


if __name__ == "__main__":
    key = jax.random.PRNGKey(0)
    k_x, k_w, k_b = jax.random.split(key, 3)

    N, Cin, Cout, Hh, Ww = 2, 4, 3, 16, 16

    # Deterministic parameter init (shapes as in nn.Conv2d(in, out, 1)).
    fan_in = Cin * 1 * 1
    bound = 1.0 / (fan_in ** 0.5)
    x = jax.random.normal(k_x, (N, Cin, Hh, Ww), dtype=jnp.float32)
    weight = jax.random.uniform(k_w, (Cout, Cin, 1, 1), jnp.float32, -bound, bound)
    bias = jax.random.uniform(k_b, (Cout,), jnp.float32, -bound, bound)

    y = out_conv(x, weight, bias)
    y = jax.block_until_ready(y)

    # Pure-JAX reference for correctness.
    y_ref = (
        jnp.einsum("nchw,oc->nohw", x, weight.reshape(Cout, Cin))
        + bias[None, :, None, None]
    )
    assert y.shape == (N, Cout, Hh, Ww)
    assert jnp.allclose(y, y_ref, atol=1e-5, rtol=1e-5)

    print("KERNEL_OK")
</pallas_src>

<mosaic_0001>
module attributes {stable_mosaic.version = 11 : i64} {
  func.func @_outconv_kernel(%arg0: i32, %arg1: i32, %arg2: memref<2x4x256xf32, #tpu.memory_space<vmem>>, %arg3: memref<3x4xf32, #tpu.memory_space<vmem>>, %arg4: memref<3x1xf32, #tpu.memory_space<vmem>>, %arg5: memref<2x3x256xf32, #tpu.memory_space<vmem>>) attributes {dimension_semantics = [#tpu.dimension_semantics<parallel>, #tpu.dimension_semantics<parallel>], iteration_bounds = array<i64: 1, 1>, scalar_prefetch = 0 : i64, scratch_operands = 0 : i64, tpu.core_type = #tpu.core_type<tc>, window_params = [{transform_indices = @transform_0, window_bounds = array<i64: 2, 4, 256>}, {pipeline_mode = #tpu.pipeline_mode<synchronous>, transform_indices = @transform_1, window_bounds = array<i64: 3, 4>}, {pipeline_mode = #tpu.pipeline_mode<synchronous>, transform_indices = @transform_2, window_bounds = array<i64: 3, 1>}, {transform_indices = @transform_3, window_bounds = array<i64: 2, 3, 256>}]} {
    %c0 = arith.constant 0 : index
    %c0_0 = arith.constant 0 : index
    %0 = vector.load %arg3[%c0, %c0_0] : memref<3x4xf32, #tpu.memory_space<vmem>>, vector<3x4xf32>
    %c0_1 = arith.constant 0 : index
    %c0_2 = arith.constant 0 : index
    %1 = vector.load %arg4[%c0_1, %c0_2] : memref<3x1xf32, #tpu.memory_space<vmem>>, vector<3x1xf32>
    %c0_3 = arith.constant 0 : index
    %c0_4 = arith.constant 0 : index
    %c0_5 = arith.constant 0 : index
    %2 = vector.load %arg2[%c0_3, %c0_4, %c0_5] : memref<2x4x256xf32, #tpu.memory_space<vmem>>, vector<1x4x256xf32>
    %3 = vector.shape_cast %2 : vector<1x4x256xf32> to vector<4x256xf32>
    %4 = vector.extract_strided_slice %0 {offsets = [0, 0], sizes = [3, 1], strides = [1, 1]} : vector<3x4xf32> to vector<3x1xf32>
    %5 = vector.extract_strided_slice %3 {offsets = [0, 0], sizes = [1, 256], strides = [1, 1]} : vector<4x256xf32> to vector<1x256xf32>
    %6 = vector.broadcast %4 : vector<3x1xf32> to vector<3x256xf32>
    %7 = vector.broadcast %5 : vector<1x256xf32> to vector<3x256xf32>
    %8 = arith.mulf %6, %7 : vector<3x256xf32>
    %9 = vector.extract_strided_slice %0 {offsets = [0, 1], sizes = [3, 1], strides = [1, 1]} : vector<3x4xf32> to vector<3x1xf32>
    %10 = vector.extract_strided_slice %3 {offsets = [1, 0], sizes = [1, 256], strides = [1, 1]} : vector<4x256xf32> to vector<1x256xf32>
    %11 = vector.broadcast %9 : vector<3x1xf32> to vector<3x256xf32>
    %12 = vector.broadcast %10 : vector<1x256xf32> to vector<3x256xf32>
    %13 = arith.mulf %11, %12 : vector<3x256xf32>
    %14 = vector.extract_strided_slice %0 {offsets = [0, 2], sizes = [3, 1], strides = [1, 1]} : vector<3x4xf32> to vector<3x1xf32>
    %15 = vector.extract_strided_slice %3 {offsets = [2, 0], sizes = [1, 256], strides = [1, 1]} : vector<4x256xf32> to vector<1x256xf32>
    %16 = vector.broadcast %14 : vector<3x1xf32> to vector<3x256xf32>
    %17 = vector.broadcast %15 : vector<1x256xf32> to vector<3x256xf32>
    %18 = arith.mulf %16, %17 : vector<3x256xf32>
    %19 = vector.extract_strided_slice %0 {offsets = [0, 3], sizes = [3, 1], strides = [1, 1]} : vector<3x4xf32> to vector<3x1xf32>
    %20 = vector.extract_strided_slice %3 {offsets = [3, 0], sizes = [1, 256], strides = [1, 1]} : vector<4x256xf32> to vector<1x256xf32>
    %21 = vector.broadcast %19 : vector<3x1xf32> to vector<3x256xf32>
    %22 = vector.broadcast %20 : vector<1x256xf32> to vector<3x256xf32>
    %23 = arith.mulf %21, %22 : vector<3x256xf32>
    %24 = arith.addf %8, %13 : vector<3x256xf32>
    %25 = arith.addf %18, %23 : vector<3x256xf32>
    %26 = arith.addf %24, %25 : vector<3x256xf32>
    %27 = vector.broadcast %1 : vector<3x1xf32> to vector<3x256xf32>
    %28 = arith.addf %26, %27 : vector<3x256xf32>
    %c0_6 = arith.constant 0 : index
    %c0_7 = arith.constant 0 : index
    %c0_8 = arith.constant 0 : index
    %29 = vector.load %arg5[%c0_6, %c0_7, %c0_8] : memref<2x3x256xf32, #tpu.memory_space<vmem>>, vector<1x3x256xf32>
    %30 = vector.shape_cast %29 : vector<1x3x256xf32> to vector<3x256xf32>
    %31 = vector.shape_cast %28 : vector<3x256xf32> to vector<1x3x256xf32>
    tpu.vector_store %arg5[%c0_6, %c0_7, %c0_8], %31 {strides = array<i32>} : memref<2x3x256xf32, #tpu.memory_space<vmem>>, vector<1x3x256xf32>,
    %c1 = arith.constant 1 : index
    %c0_9 = arith.constant 0 : index
    %c0_10 = arith.constant 0 : index
    %32 = vector.load %arg2[%c1, %c0_9, %c0_10] : memref<2x4x256xf32, #tpu.memory_space<vmem>>, vector<1x4x256xf32>
    %33 = vector.shape_cast %32 : vector<1x4x256xf32> to vector<4x256xf32>
    %34 = vector.extract_strided_slice %0 {offsets = [0, 0], sizes = [3, 1], strides = [1, 1]} : vector<3x4xf32> to vector<3x1xf32>
    %35 = vector.extract_strided_slice %33 {offsets = [0, 0], sizes = [1, 256], strides = [1, 1]} : vector<4x256xf32> to vector<1x256xf32>
    %36 = vector.broadcast %34 : vector<3x1xf32> to vector<3x256xf32>
    %37 = vector.broadcast %35 : vector<1x256xf32> to vector<3x256xf32>
    %38 = arith.mulf %36, %37 : vector<3x256xf32>
    %39 = vector.extract_strided_slice %0 {offsets = [0, 1], sizes = [3, 1], strides = [1, 1]} : vector<3x4xf32> to vector<3x1xf32>
    %40 = vector.extract_strided_slice %33 {offsets = [1, 0], sizes = [1, 256], strides = [1, 1]} : vector<4x256xf32> to vector<1x256xf32>
    %41 = vector.broadcast %39 : vector<3x1xf32> to vector<3x256xf32>
    %42 = vector.broadcast %40 : vector<1x256xf32> to vector<3x256xf32>
    %43 = arith.mulf %41, %42 : vector<3x256xf32>
    %44 = vector.extract_strided_slice %0 {offsets = [0, 2], sizes = [3, 1], strides = [1, 1]} : vector<3x4xf32> to vector<3x1xf32>
    %45 = vector.extract_strided_slice %33 {offsets = [2, 0], sizes = [1, 256], strides = [1, 1]} : vector<4x256xf32> to vector<1x256xf32>
    %46 = vector.broadcast %44 : vector<3x1xf32> to vector<3x256xf32>
    %47 = vector.broadcast %45 : vector<1x256xf32> to vector<3x256xf32>
    %48 = arith.mulf %46, %47 : vector<3x256xf32>
    %49 = vector.extract_strided_slice %0 {offsets = [0, 3], sizes = [3, 1], strides = [1, 1]} : vector<3x4xf32> to vector<3x1xf32>
    %50 = vector.extract_strided_slice %33 {offsets = [3, 0], sizes = [1, 256], strides = [1, 1]} : vector<4x256xf32> to vector<1x256xf32>
    %51 = vector.broadcast %49 : vector<3x1xf32> to vector<3x256xf32>
    %52 = vector.broadcast %50 : vector<1x256xf32> to vector<3x256xf32>
    %53 = arith.mulf %51, %52 : vector<3x256xf32>
    %54 = arith.addf %38, %43 : vector<3x256xf32>
    %55 = arith.addf %48, %53 : vector<3x256xf32>
    %56 = arith.addf %54, %55 : vector<3x256xf32>
    %57 = vector.broadcast %1 : vector<3x1xf32> to vector<3x256xf32>
    %58 = arith.addf %56, %57 : vector<3x256xf32>
    %c1_11 = arith.constant 1 : index
    %c0_12 = arith.constant 0 : index
    %c0_13 = arith.constant 0 : index
    %59 = vector.load %arg5[%c1_11, %c0_12, %c0_13] : memref<2x3x256xf32, #tpu.memory_space<vmem>>, vector<1x3x256xf32>
    %60 = vector.shape_cast %59 : vector<1x3x256xf32> to vector<3x256xf32>
    %61 = vector.shape_cast %58 : vector<3x256xf32> to vector<1x3x256xf32>
    tpu.vector_store %arg5[%c1_11, %c0_12, %c0_13], %61 {strides = array<i32>} : memref<2x3x256xf32, #tpu.memory_space<vmem>>, vector<1x3x256xf32>,
    return
  }
  func.func @transform_0(%arg0: i32, %arg1: i32) -> (i32, i32, i32) {
    %c0_i32 = arith.constant 0 : i32
    %c0_i32_0 = arith.constant 0 : i32
    return %arg0, %c0_i32, %arg1 : i32, i32, i32
  }
  func.func @transform_1(%arg0: i32, %arg1: i32) -> (i32, i32) {
    %c0_i32 = arith.constant 0 : i32
    %c0_i32_0 = arith.constant 0 : i32
    %c0_i32_1 = arith.constant 0 : i32
    return %c0_i32, %c0_i32_0 : i32, i32
  }
  func.func @transform_2(%arg0: i32, %arg1: i32) -> (i32, i32) {
    %c0_i32 = arith.constant 0 : i32
    %c0_i32_0 = arith.constant 0 : i32
    %c0_i32_1 = arith.constant 0 : i32
    return %c0_i32, %c0_i32_0 : i32, i32
  }
  func.func @transform_3(%arg0: i32, %arg1: i32) -> (i32, i32, i32) {
    %c0_i32 = arith.constant 0 : i32
    %c0_i32_0 = arith.constant 0 : i32
    return %arg0, %c0_i32, %arg1 : i32, i32, i32
  }
}

</mosaic_0001>

<llo_original>
// kernel: tpu_custom_call.1
$region0: #{tpu_custom_call.1}
  #allocation0 [shape = 'u32[]', space=smem, size = 0x4, offset = 0x4, fixed_abs, tag = 'smem constant byte address 0x4 - core index']
  #allocation1 [shape = 'u32[144,128]{1,0:T(1,128)}', space=vmem, size = 0x12000, scoped, tag = 'internal scratch']
  %s0 = inlined_call_operand.hbm [shape: f32[2,4,256], index: 0, kind: input, shape index: {}]
  %s1 = inlined_call_operand.vmem [shape: f32[3,4], index: 1, kind: input, shape index: {}]
  %s2 = inlined_call_operand.vmem [shape: f32[3,1], index: 2, kind: input, shape index: {}]
  %s3 = inlined_call_operand.vmem [shape: f32[2,3,256], index: 3, kind: output, shape index: {}]
  %s4 = sld [smem:[#allocation0]]
  $region26: #{tpu_custom_call.1} parent=0
    _
  %s6 = ssub.s32 1, %s4
  %s7 = scalar_select 0, %s6, %s4
  $region1: #{tpu_custom_call.1} parent=0
    #allocation2 [shape = 'u8[8192]{0}', space=vmem, size = 0x2000, scoped, tag = 'input window, operand 0, single buffered']
    #allocation3 [shape = 's32[1]{0}', space=sflag, size = 0x4, scoped, tag = 'scoped memory for tpu_custom_call.1']
    %8 = vsyncpa [#allocation3], 0
    // Predicated region
    $region2: #{tpu_custom_call.1} parent=1 // pred_check
      _
    $region3: #{tpu_custom_call.1} parent=1 // pred_check_branch
      %10 = sbr.rel (0) target = $region5
    $region4: #{tpu_custom_call.1} parent=1 // pred_region
      %s12 = ssub.s32 256, 256
      %13 = vsyncadd [#allocation3], %s12
      %s14 = sshll.u32 [#allocation2], 4
      %s15 = int_to_ptr.vmem [resolvable:$true] %s14
      %20 = dma.hbm_to_vmem [thread:$0]  %s0, 256, %s15, [#allocation3], 128, 128, 8
    $region5: #{tpu_custom_call.1} parent=1 // pred_fallthru
      _
    // Predicated region
    $region6: #{tpu_custom_call.1} parent=1 // pred_check
      _
    $region7: #{tpu_custom_call.1} parent=1 // pred_check_branch
      %22 = sbr.rel (0) target = $region9
    $region8: #{tpu_custom_call.1} parent=1 // pred_region
      _
    $region9: #{tpu_custom_call.1} parent=1 // pred_fallthru
      _
    // Predicated region
    $region10: #{tpu_custom_call.1} parent=1 // pred_check
      _
    $region11: #{tpu_custom_call.1} parent=1 // pred_check_branch
      %24 = sbr.rel (0) target = $region13
    $region12: #{tpu_custom_call.1} parent=1 // pred_region
      _
    $region13: #{tpu_custom_call.1} parent=1 // pred_fallthru
      _
    // Predicated region
    $region14: #{tpu_custom_call.1} parent=1 // pred_check
      _
    $region15: #{tpu_custom_call.1} parent=1 // pred_check_branch
      %26 = sbr.rel (0) target = $region17
    $region16: #{tpu_custom_call.1} parent=1 // pred_region
      %27 = dma.done [#allocation3], 256
    $region17: #{tpu_custom_call.1} parent=1 // pred_fallthru
      _
    %v28 = vld [vmem:[%s1] sm:$0x7]
    %v29 = vld [vmem:[%s2] sm:$0x7]
    %v30 = vld [vmem:[#allocation2] sm:$0xff]
    %32 = vset.pattern.permute.xlu0 0
    %33 = vperm.xlu0 %32, %v28
    %v34 = vpop.permute.xlu0 %33
    %v37 = vlaneseq
    %v38 = vshrl.u32 %v37, 7
    %v39 = vsub.s32 0, %v38
    %v40 = vrot.slane %v30, %v39
    %v41 = vlaneseq
    %v42 = vshrl.u32 %v41, 7
    %v43 = vsub.s32 4, %v42
    %v44 = vrot.slane %v30, %v43
    %v47 = vlaneseq
    %v48 = vshrl.u32 %v47, 7
    %v49 = vsub.s32 0, %v48
    %v50 = vrot.slane %v40, %v49
    %v51 = vlaneseq
    %v52 = vshrl.u32 %v51, 7
    %v53 = vsub.s32 0, %v52
    %v54 = vrot.slane %v44, %v53
    %v55 = vmul.f32 %v34, %v50
    %v56 = vmul.f32 %v34, %v54
    %57 = vset.pattern.permute.xlu0 1
    %58 = vperm.xlu0 %57, %v28
    %v59 = vpop.permute.xlu0 %58
    %v61 = vlaneseq
    %v62 = vshrl.u32 %v61, 7
    %v63 = vsub.s32 1, %v62
    %v64 = vrot.slane %v30, %v63
    %v65 = vlaneseq
    %v66 = vshrl.u32 %v65, 7
    %v67 = vsub.s32 5, %v66
    %v68 = vrot.slane %v30, %v67
    %v71 = vlaneseq
    %v72 = vshrl.u32 %v71, 7
    %v73 = vsub.s32 1, %v72
    %v74 = vrot.slane %v64, %v73
    %v75 = vlaneseq
    %v76 = vshrl.u32 %v75, 7
    %v77 = vsub.s32 1, %v76
    %v78 = vrot.slane %v68, %v77
    %v79 = vmul.f32 %v59, %v74
    %v80 = vmul.f32 %v59, %v78
    %81 = vset.pattern.permute.xlu0 2
    %82 = vperm.xlu0 %81, %v28
    %v83 = vpop.permute.xlu0 %82
    %v85 = vlaneseq
    %v86 = vshrl.u32 %v85, 7
    %v87 = vsub.s32 2, %v86
    %v88 = vrot.slane %v30, %v87
    %v89 = vlaneseq
    %v90 = vshrl.u32 %v89, 7
    %v91 = vsub.s32 6, %v90
    %v92 = vrot.slane %v30, %v91
    %v95 = vlaneseq
    %v96 = vshrl.u32 %v95, 7
    %v97 = vsub.s32 2, %v96
    %v98 = vrot.slane %v88, %v97
    %v99 = vlaneseq
    %v100 = vshrl.u32 %v99, 7
    %v101 = vsub.s32 2, %v100
    %v102 = vrot.slane %v92, %v101
    %v103 = vmul.f32 %v83, %v98
    %v104 = vmul.f32 %v83, %v102
    %105 = vset.pattern.permute.xlu0 3
    %106 = vperm.xlu0 %105, %v28
    %v107 = vpop.permute.xlu0 %106
    %v109 = vlaneseq
    %v110 = vshrl.u32 %v109, 7
    %v111 = vsub.s32 3, %v110
    %v112 = vrot.slane %v30, %v111
    %v113 = vlaneseq
    %v114 = vshrl.u32 %v113, 7
    %v115 = vsub.s32 7, %v114
    %v116 = vrot.slane %v30, %v115
    %v119 = vlaneseq
    %v120 = vshrl.u32 %v119, 7
    %v121 = vsub.s32 3, %v120
    %v122 = vrot.slane %v112, %v121
    %v123 = vlaneseq
    %v124 = vshrl.u32 %v123, 7
    %v125 = vsub.s32 3, %v124
    %v126 = vrot.slane %v116, %v125
    %v127 = vmul.f32 %v107, %v122
    %v128 = vmul.f32 %v107, %v126
    %v129 = vadd.f32 %v55, %v79
    %v130 = vadd.f32 %v56, %v80
    %v131 = vadd.f32 %v103, %v127
    %v132 = vadd.f32 %v104, %v128
    %v133 = vadd.f32 %v129, %v131
    %v134 = vadd.f32 %v130, %v132
    %136 = vset.pattern.permute.xlu0 0
    %137 = vperm.xlu0 %136, %v29
    %v138 = vpop.permute.xlu0 %137
    %v140 = vadd.f32 %v133, %v138
    %v141 = vadd.f32 %v134, %v138
    %v144 = vcombine.low %v140, %v141
    %146 = vst [vmem:[%s3] sm:$0x77] %v144
    %s147 = scalar_lea.vmem [#allocation2], 8
    %v148 = vld [vmem:[%s147] sm:$0xff]
    %v150 = vlaneseq
    %v151 = vshrl.u32 %v150, 7
    %v152 = vsub.s32 0, %v151
    %v153 = vrot.slane %v148, %v152
    %v154 = vlaneseq
    %v155 = vshrl.u32 %v154, 7
    %v156 = vsub.s32 4, %v155
    %v157 = vrot.slane %v148, %v156
    %v160 = vlaneseq
    %v161 = vshrl.u32 %v160, 7
    %v162 = vsub.s32 0, %v161
    %v163 = vrot.slane %v153, %v162
    %v164 = vlaneseq
    %v165 = vshrl.u32 %v164, 7
    %v166 = vsub.s32 0, %v165
    %v167 = vrot.slane %v157, %v166
    %v168 = vmul.f32 %v34, %v163
    %v169 = vmul.f32 %v34, %v167
    %v170 = vlaneseq
    %v171 = vshrl.u32 %v170, 7
    %v172 = vsub.s32 1, %v171
    %v173 = vrot.slane %v148, %v172
    %v174 = vlaneseq
    %v175 = vshrl.u32 %v174, 7
    %v176 = vsub.s32 5, %v175
    %v177 = vrot.slane %v148, %v176
    %v180 = vlaneseq
    %v181 = vshrl.u32 %v180, 7
    %v182 = vsub.s32 1, %v181
    %v183 = vrot.slane %v173, %v182
    %v184 = vlaneseq
    %v185 = vshrl.u32 %v184, 7
    %v186 = vsub.s32 1, %v185
    %v187 = vrot.slane %v177, %v186
    %v188 = vmul.f32 %v59, %v183
    %v189 = vmul.f32 %v59, %v187
    %v190 = vlaneseq
    %v191 = vshrl.u32 %v190, 7
    %v192 = vsub.s32 2, %v191
    %v193 = vrot.slane %v148, %v192
    %v194 = vlaneseq
    %v195 = vshrl.u32 %v194, 7
    %v196 = vsub.s32 6, %v195
    %v197 = vrot.slane %v148, %v196
    %v200 = vlaneseq
    %v201 = vshrl.u32 %v200, 7
    %v202 = vsub.s32 2, %v201
    %v203 = vrot.slane %v193, %v202
    %v204 = vlaneseq
    %v205 = vshrl.u32 %v204, 7
    %v206 = vsub.s32 2, %v205
    %v207 = vrot.slane %v197, %v206
    %v208 = vmul.f32 %v83, %v203
    %v209 = vmul.f32 %v83, %v207
    %v210 = vlaneseq
    %v211 = vshrl.u32 %v210, 7
    %v212 = vsub.s32 3, %v211
    %v213 = vrot.slane %v148, %v212
    %v214 = vlaneseq
    %v215 = vshrl.u32 %v214, 7
    %v216 = vsub.s32 7, %v215
    %v217 = vrot.slane %v148, %v216
    %v220 = vlaneseq
    %v221 = vshrl.u32 %v220, 7
    %v222 = vsub.s32 3, %v221
    %v223 = vrot.slane %v213, %v222
    %v224 = vlaneseq
    %v225 = vshrl.u32 %v224, 7
    %v226 = vsub.s32 3, %v225
    %v227 = vrot.slane %v217, %v226
    %v228 = vmul.f32 %v107, %v223
    %v229 = vmul.f32 %v107, %v227
    %v230 = vadd.f32 %v168, %v188
    %v231 = vadd.f32 %v169, %v189
    %v232 = vadd.f32 %v208, %v228
    %v233 = vadd.f32 %v209, %v229
    %v234 = vadd.f32 %v230, %v232
    %v235 = vadd.f32 %v231, %v233
    %v236 = vadd.f32 %v234, %v138
    %v237 = vadd.f32 %v235, %v138
    %v240 = vcombine.low %v236, %v237
    %s242 = scalar_lea.vmem %s3, 8
    %243 = vst [vmem:[%s242] sm:$0x77] %v240
    // Predicated region
    $region18: #{tpu_custom_call.1} parent=1 // pred_check
      _
    $region19: #{tpu_custom_call.1} parent=1 // pred_check_branch
      %245 = sbr.rel (0) target = $region21
    $region20: #{tpu_custom_call.1} parent=1 // pred_region
      _
    $region21: #{tpu_custom_call.1} parent=1 // pred_fallthru
      _
    // Predicated region
    $region22: #{tpu_custom_call.1} parent=1 // pred_check
      _
    $region23: #{tpu_custom_call.1} parent=1 // pred_check_branch
      %247 = sbr.rel (0) target = $region25
    $region24: #{tpu_custom_call.1} parent=1 // pred_region
      _
    $region25: #{tpu_custom_call.1} parent=1 // pred_fallthru
      _
    %248 = vsyncpa [#allocation3], 1

</llo_original>
